<compile_context>
chip_gen: v7x
topology: tpu7x:2x2x1
jax: 0.10.0
libtpu: 0.0.40
codegen_flags: <defaults>
</compile_context>

<pallas_src>
import jax
import jax.numpy as jnp
from jax import lax
from jax.experimental import pallas as pl
from jax.experimental.pallas import tpu as pltpu

VOCAB = 360000
EMB_DIM = 64
INPUT_DIM = 32                    # sequence length of token ids
FLAT_DIM = INPUT_DIM * EMB_DIM    # 2048
HIDDEN1 = 32
HIDDEN2 = 16
OUTPUT_DIM = 1
NEG_SLOPE = 0.1
MAX_TILE_B = 1024                 # 1024*2048*2B = 4 MiB per activation buffer


def _leaky_relu(x, slope=NEG_SLOPE):
    return jnp.where(x >= 0, x, slope * x)


def _round_up(x, m):
    return ((x + m - 1) // m) * m


def _choose_tile_b(b):
    """Batch tile: big enough to amortize per-step overhead, small enough for
    VMEM, lane-aligned (multiple of 128) and yielding >=2 grid steps whenever
    b > 128 so the "parallel" batch axis can shard over v7x's 2 TensorCores."""
    if b <= 128:
        return b                                  # single tile == full array dims
    return min(MAX_TILE_B, _round_up(-(-b // 2), 128))


def mlp_kernel(x_ref, w1_ref, b1_ref, w2_ref, b2_ref, w3t_ref, b3_ref, o_ref):
    # x: (tile_b, 2048) bf16   w1: (2048, 32) bf16   w2: (32, 16) f32
    # fc1 runs on the MXU in bf16 with f32 accumulation; all post-matmul
    # elementwise math (bias, LeakyReLU, sigmoid) stays f32 (v5e-safe).
    h1 = jnp.dot(x_ref[...], w1_ref[...], preferred_element_type=jnp.float32)
    h1 = _leaky_relu(h1 + b1_ref[...])

    h2 = jnp.dot(h1, w2_ref[...], preferred_element_type=jnp.float32)
    h2 = _leaky_relu(h2 + b2_ref[...])

    # fc3: contract on the 16-wide hidden axis with the activation as the
    # (transposed) rhs so the result lands as a lane-dense (OUTPUT_DIM, tile_b)
    # row -> full-lane unmasked stores instead of a (tile_b, 1) masked column.
    h3 = lax.dot_general(
        w3t_ref[...], h2,
        dimension_numbers=(((1,), (1,)), ((), ())),
        preferred_element_type=jnp.float32,
    )                                             # (OUTPUT_DIM, tile_b)
    o_ref[...] = jax.nn.sigmoid(h3 + b3_ref[...])


def net_forward(x_ids, params):
    """x_ids: (B, INPUT_DIM) int32 token ids -> (B, OUTPUT_DIM) f32."""
    emb, w1, b1, w2, b2, w3t, b3 = params
    B = x_ids.shape[0]

    # TODO(synk): the embedding row-gather stays in XLA glue; an in-kernel DMA
    # gather would need ~32*tile_b 128-byte descriptors per tile (descriptor
    # overhead bound).  The table is stored bf16 to halve the gather traffic.
    x_emb = jnp.take(emb, x_ids, axis=0)                       # (B, 32, 64)
    x_flat = x_emb.reshape(B, FLAT_DIM).astype(w1.dtype)       # (B, 2048) bf16

    # Only tiny batches get padded (< 8 rows, negligible copy); larger batches
    # rely on Pallas' ragged last block so no full-array pad copy exists.
    b_work = B
    if B < 8:
        b_work = 8
        x_flat = jnp.pad(x_flat, ((0, b_work - B), (0, 0)))

    tile_b = _choose_tile_b(b_work)
    num_tiles = pl.cdiv(b_work, tile_b)
    out_cols = num_tiles * tile_b

    const = lambda i: (0, 0)
    in_specs = [
        pl.BlockSpec((tile_b, FLAT_DIM), lambda i: (i, 0)),     # activation tile (streamed)
        pl.BlockSpec((FLAT_DIM, HIDDEN1), const),               # w1 (VMEM-resident)
        pl.BlockSpec((1, HIDDEN1), const),                      # b1
        pl.BlockSpec((HIDDEN1, HIDDEN2), const),                # w2
        pl.BlockSpec((1, HIDDEN2), const),                      # b2
        pl.BlockSpec((OUTPUT_DIM, HIDDEN2), const),             # w3 (torch (out,in) layout)
        pl.BlockSpec((OUTPUT_DIM, 1), const),                   # b3
    ]
    out_spec = pl.BlockSpec((OUTPUT_DIM, tile_b), lambda i: (0, i))

    weight_bytes = sum(
        int(w.size) * jnp.dtype(w.dtype).itemsize for w in (w1, b1, w2, b2, w3t, b3)
    )
    rows = num_tiles * tile_b
    cost = pl.CostEstimate(
        flops=2 * rows * (FLAT_DIM * HIDDEN1 + HIDDEN1 * HIDDEN2 + HIDDEN2 * OUTPUT_DIM),
        transcendentals=rows * OUTPUT_DIM,
        bytes_accessed=(
            b_work * FLAT_DIM * jnp.dtype(x_flat.dtype).itemsize
            + weight_bytes
            + out_cols * OUTPUT_DIM * 4
        ),
    )

    out = pl.pallas_call(
        mlp_kernel,
        out_shape=jax.ShapeDtypeStruct((OUTPUT_DIM, out_cols), jnp.float32),
        grid=(num_tiles,),
        in_specs=in_specs,
        out_specs=out_spec,
        compiler_params=pltpu.CompilerParams(
            dimension_semantics=("parallel",),
        ),
        cost_estimate=cost,
    )(x_flat, w1, b1, w2, b2, w3t, b3)

    # (OUTPUT_DIM, out_cols) -> (B, OUTPUT_DIM); padded/ragged tail discarded.
    return out[:, :B].T


def net_reference(x_ids, params):
    """Pure-JAX reference (same dtypes / accumulation) for correctness checks."""
    emb, w1, b1, w2, b2, w3t, b3 = params
    x = jnp.take(emb, x_ids, axis=0).reshape(x_ids.shape[0], FLAT_DIM).astype(w1.dtype)
    h1 = _leaky_relu(jnp.dot(x, w1, preferred_element_type=jnp.float32) + b1)
    h2 = _leaky_relu(jnp.dot(h1, w2, preferred_element_type=jnp.float32) + b2)
    h3 = jnp.dot(h2, w3t.T, preferred_element_type=jnp.float32) + b3.T
    return jax.nn.sigmoid(h3)


def init_params(key, *, embed_dtype=jnp.bfloat16):
    """Deterministic synthetic parameters matching the PyTorch shapes.

    fc1/fc2 weights are stored (in_features, out_features) so the kernel's
    x @ W + b matches torch's x @ W.T + b; the fc3 weight keeps torch's
    (out, in) layout because the kernel contracts it against h2 directly.
    The embedding table and fc1 weight are bf16 (HBM-bandwidth-bound path).
    """
    k_emb, k1, k2, k3, kb1, kb2, kb3 = jax.random.split(key, 7)
    emb = (jax.random.normal(k_emb, (VOCAB, EMB_DIM), jnp.float32) * 0.02).astype(embed_dtype)
    w1 = (jax.random.normal(k1, (FLAT_DIM, HIDDEN1), jnp.float32) * 0.02).astype(embed_dtype)
    b1 = jax.random.normal(kb1, (1, HIDDEN1), jnp.float32) * 0.01
    w2 = jax.random.normal(k2, (HIDDEN1, HIDDEN2), jnp.float32) * 0.05
    b2 = jax.random.normal(kb2, (1, HIDDEN2), jnp.float32) * 0.01
    w3t = jax.random.normal(k3, (OUTPUT_DIM, HIDDEN2), jnp.float32) * 0.1
    b3 = jax.random.normal(kb3, (OUTPUT_DIM, 1), jnp.float32) * 0.01
    return (emb, w1, b1, w2, b2, w3t, b3)


if __name__ == "__main__":
    key = jax.random.PRNGKey(0)
    k_params, k_ids, k_ids2 = jax.random.split(key, 3)

    params = init_params(k_params)
    fwd = jax.jit(net_forward)
    ref = jax.jit(net_reference)

    # Small-batch case (single tile, tiny-B pad path).
    B = 2
    x_ids = jax.random.randint(k_ids, (B, INPUT_DIM), 0, VOCAB, dtype=jnp.int32)
    y = fwd(x_ids, params)
    jax.block_until_ready(y)
    y_ref = ref(x_ids, params)
    jax.block_until_ready(y_ref)
    assert y.shape == (B, OUTPUT_DIM)
    assert y.dtype == jnp.float32
    assert bool(jnp.all((y >= 0.0) & (y <= 1.0)))
    assert bool(jnp.allclose(y, y_ref, atol=5e-3, rtol=5e-3))

    # Multi-tile / ragged-last-block / two-TensorCore path.
    B2 = 300
    x_ids2 = jax.random.randint(k_ids2, (B2, INPUT_DIM), 0, VOCAB, dtype=jnp.int32)
    y2 = fwd(x_ids2, params)
    jax.block_until_ready(y2)
    y2_ref = ref(x_ids2, params)
    jax.block_until_ready(y2_ref)
    assert y2.shape == (B2, OUTPUT_DIM)
    assert bool(jnp.all((y2 >= 0.0) & (y2 <= 1.0)))
    assert bool(jnp.allclose(y2, y2_ref, atol=5e-3, rtol=5e-3))

    print("KERNEL_OK")
</pallas_src>

<mosaic_0001>
module attributes {stable_mosaic.version = 11 : i64} {
  func.func private @main(%arg0: i32) attributes {dimension_semantics = [#tpu.dimension_semantics<core_parallel>], iteration_bounds = array<i64: 2>, tpu.core_type = #tpu.core_type<sc_scalar_subcore>, window_params = []} {
    return
  }
}

module attributes {stable_mosaic.version = 11 : i64} {
  func.func private @main(%arg0: i32) attributes {dimension_semantics = [#tpu.dimension_semantics<core_parallel>], iteration_bounds = array<i64: 2>, tpu.core_type = #tpu.core_type<sc_scalar_subcore>, window_params = []} {
    return
  }
}

module attributes {stable_mosaic.version = 11 : i64} {
  func.func @mlp_kernel(%arg0: i32, %arg1: memref<8x2048xbf16, #tpu.memory_space<vmem>>, %arg2: memref<2048x32xbf16, #tpu.memory_space<vmem>>, %arg3: memref<1x32xf32, #tpu.memory_space<vmem>>, %arg4: memref<32x16xf32, #tpu.memory_space<vmem>>, %arg5: memref<1x16xf32, #tpu.memory_space<vmem>>, %arg6: memref<1x16xf32, #tpu.memory_space<vmem>>, %arg7: memref<1x1xf32, #tpu.memory_space<vmem>>, %arg8: memref<1x8xf32, #tpu.memory_space<vmem>>) attributes {dimension_semantics = [#tpu.dimension_semantics<parallel>], iteration_bounds = array<i64: 1>, scalar_prefetch = 0 : i64, scratch_operands = 0 : i64, tpu.core_type = #tpu.core_type<tc>, window_params = [{transform_indices = @transform_0, window_bounds = array<i64: 8, 2048>}, {pipeline_mode = #tpu.pipeline_mode<synchronous>, transform_indices = @transform_1, window_bounds = array<i64: 2048, 32>}, {pipeline_mode = #tpu.pipeline_mode<synchronous>, transform_indices = @transform_2, window_bounds = array<i64: 1, 32>}, {pipeline_mode = #tpu.pipeline_mode<synchronous>, transform_indices = @transform_3, window_bounds = array<i64: 32, 16>}, {pipeline_mode = #tpu.pipeline_mode<synchronous>, transform_indices = @transform_4, window_bounds = array<i64: 1, 16>}, {pipeline_mode = #tpu.pipeline_mode<synchronous>, transform_indices = @transform_5, window_bounds = array<i64: 1, 16>}, {pipeline_mode = #tpu.pipeline_mode<synchronous>, transform_indices = @transform_6, window_bounds = array<i64: 1, 1>}, {transform_indices = @transform_7, window_bounds = array<i64: 1, 8>}]} {
    %c0 = arith.constant 0 : index
    %c0_0 = arith.constant 0 : index
    %0 = vector.load %arg1[%c0, %c0_0] : memref<8x2048xbf16, #tpu.memory_space<vmem>>, vector<8x2048xbf16>
    %c0_1 = arith.constant 0 : index
    %c0_2 = arith.constant 0 : index
    %1 = vector.load %arg2[%c0_1, %c0_2] : memref<2048x32xbf16, #tpu.memory_space<vmem>>, vector<2048x32xbf16>
    %cst = arith.constant dense<0.000000e+00> : vector<8x32xf32>
    %2 = tpu.matmul %0, %1, %cst {dimension_numbers = #tpu.dot_dimension_numbers<[1], [0], [0], [1], [0, 0, 1, 1], [], []>} : vector<8x2048xbf16>, vector<2048x32xbf16>, vector<8x32xf32> -> vector<8x32xf32>
    %c0_3 = arith.constant 0 : index
    %c0_4 = arith.constant 0 : index
    %3 = vector.load %arg3[%c0_3, %c0_4] : memref<1x32xf32, #tpu.memory_space<vmem>>, vector<1x32xf32>
    %4 = vector.broadcast %3 : vector<1x32xf32> to vector<8x32xf32>
    %5 = arith.addf %2, %4 : vector<8x32xf32>
    %cst_5 = arith.constant 0.000000e+00 : f32
    %6 = vector.broadcast %cst_5 : f32 to vector<8x32xf32>
    %7 = arith.cmpf oge, %5, %6 : vector<8x32xf32>
    %cst_6 = arith.constant 1.000000e-01 : f32
    %8 = vector.broadcast %cst_6 : f32 to vector<8x32xf32>
    %9 = arith.mulf %8, %5 : vector<8x32xf32>
    %10 = arith.select %7, %5, %9 : vector<8x32xi1>, vector<8x32xf32>
    %c0_7 = arith.constant 0 : index
    %c0_8 = arith.constant 0 : index
    %11 = vector.load %arg4[%c0_7, %c0_8] : memref<32x16xf32, #tpu.memory_space<vmem>>, vector<32x16xf32>
    %cst_9 = arith.constant dense<0.000000e+00> : vector<8x16xf32>
    %12 = tpu.matmul %10, %11, %cst_9 {dimension_numbers = #tpu.dot_dimension_numbers<[1], [0], [0], [1], [0, 0, 1, 1], [], []>} : vector<8x32xf32>, vector<32x16xf32>, vector<8x16xf32> -> vector<8x16xf32>
    %c0_10 = arith.constant 0 : index
    %c0_11 = arith.constant 0 : index
    %13 = vector.load %arg5[%c0_10, %c0_11] : memref<1x16xf32, #tpu.memory_space<vmem>>, vector<1x16xf32>
    %14 = vector.broadcast %13 : vector<1x16xf32> to vector<8x16xf32>
    %15 = arith.addf %12, %14 : vector<8x16xf32>
    %cst_12 = arith.constant 0.000000e+00 : f32
    %16 = vector.broadcast %cst_12 : f32 to vector<8x16xf32>
    %17 = arith.cmpf oge, %15, %16 : vector<8x16xf32>
    %cst_13 = arith.constant 1.000000e-01 : f32
    %18 = vector.broadcast %cst_13 : f32 to vector<8x16xf32>
    %19 = arith.mulf %18, %15 : vector<8x16xf32>
    %20 = arith.select %17, %15, %19 : vector<8x16xi1>, vector<8x16xf32>
    %c0_14 = arith.constant 0 : index
    %c0_15 = arith.constant 0 : index
    %21 = vector.load %arg6[%c0_14, %c0_15] : memref<1x16xf32, #tpu.memory_space<vmem>>, vector<1x16xf32>
    %cst_16 = arith.constant dense<0.000000e+00> : vector<1x8xf32>
    %22 = tpu.matmul %21, %20, %cst_16 {dimension_numbers = #tpu.dot_dimension_numbers<[1], [1], [0], [0], [0, 0, 1, 0], [], []>} : vector<1x16xf32>, vector<8x16xf32>, vector<1x8xf32> -> vector<1x8xf32>
    %c0_17 = arith.constant 0 : index
    %c0_18 = arith.constant 0 : index
    %23 = vector.load %arg7[%c0_17, %c0_18] : memref<1x1xf32, #tpu.memory_space<vmem>>, vector<1x1xf32>
    %24 = vector.broadcast %23 : vector<1x1xf32> to vector<1x8xf32>
    %25 = arith.addf %22, %24 : vector<1x8xf32>
    %26 = arith.negf %25 : vector<1x8xf32>
    %27 = math.exp %26 : vector<1x8xf32>
    %cst_19 = arith.constant 1.000000e+00 : f32
    %28 = vector.broadcast %cst_19 : f32 to vector<1x8xf32>
    %29 = arith.addf %28, %27 : vector<1x8xf32>
    %30 = arith.divf %28, %29 : vector<1x8xf32>
    %c0_20 = arith.constant 0 : index
    %c0_21 = arith.constant 0 : index
    %31 = vector.load %arg8[%c0_20, %c0_21] : memref<1x8xf32, #tpu.memory_space<vmem>>, vector<1x8xf32>
    tpu.vector_store %arg8[%c0_20, %c0_21], %30 {strides = array<i32>} : memref<1x8xf32, #tpu.memory_space<vmem>>, vector<1x8xf32>,
    return
  }
  func.func @transform_0(%arg0: i32) -> (i32, i32) {
    %c0_i32 = arith.constant 0 : i32
    %c0_i32_0 = arith.constant 0 : i32
    return %arg0, %c0_i32 : i32, i32
  }
  func.func @transform_1(%arg0: i32) -> (i32, i32) {
    %c0_i32 = arith.constant 0 : i32
    %c0_i32_0 = arith.constant 0 : i32
    %c0_i32_1 = arith.constant 0 : i32
    return %c0_i32, %c0_i32_0 : i32, i32
  }
  func.func @transform_2(%arg0: i32) -> (i32, i32) {
    %c0_i32 = arith.constant 0 : i32
    %c0_i32_0 = arith.constant 0 : i32
    %c0_i32_1 = arith.constant 0 : i32
    return %c0_i32, %c0_i32_0 : i32, i32
  }
  func.func @transform_3(%arg0: i32) -> (i32, i32) {
    %c0_i32 = arith.constant 0 : i32
    %c0_i32_0 = arith.constant 0 : i32
    %c0_i32_1 = arith.constant 0 : i32
    return %c0_i32, %c0_i32_0 : i32, i32
  }
  func.func @transform_4(%arg0: i32) -> (i32, i32) {
    %c0_i32 = arith.constant 0 : i32
    %c0_i32_0 = arith.constant 0 : i32
    %c0_i32_1 = arith.constant 0 : i32
    return %c0_i32, %c0_i32_0 : i32, i32
  }
  func.func @transform_5(%arg0: i32) -> (i32, i32) {
    %c0_i32 = arith.constant 0 : i32
    %c0_i32_0 = arith.constant 0 : i32
    %c0_i32_1 = arith.constant 0 : i32
    return %c0_i32, %c0_i32_0 : i32, i32
  }
  func.func @transform_6(%arg0: i32) -> (i32, i32) {
    %c0_i32 = arith.constant 0 : i32
    %c0_i32_0 = arith.constant 0 : i32
    %c0_i32_1 = arith.constant 0 : i32
    return %c0_i32, %c0_i32_0 : i32, i32
  }
  func.func @transform_7(%arg0: i32) -> (i32, i32) {
    %c0_i32 = arith.constant 0 : i32
    %c0_i32_0 = arith.constant 0 : i32
    return %c0_i32, %arg0 : i32, i32
  }
}

</mosaic_0001>

<llo_original>
// kernel: net_forward.1
$region0: #{net_forward.1}
  #allocation0 [shape = 'u32[]', space=smem, size = 0x4, offset = 0x4, fixed_abs, tag = 'smem constant byte address 0x4 - core index']
  #allocation1 [shape = 'u32[144,128]{1,0:T(1,128)}', space=vmem, size = 0x12000, scoped, tag = 'internal scratch']
  #allocation2 [shape = 'f32[1,1]{1,0:T(1,128)S(1)}', space=vmem, size = 0x200, scoped, tag = 'scoped memory for net_forward.1']
  %s0 = inlined_call_operand.vmem [shape: bf16[8,2048], index: 0, kind: input, shape index: {}]
  %s1 = inlined_call_operand.vmem [shape: bf16[2048,32], index: 1, kind: input, shape index: {}]
  %s2 = inlined_call_operand.vmem [shape: f32[1,32], index: 2, kind: input, shape index: {}]
  %s3 = inlined_call_operand.vmem [shape: f32[32,16], index: 3, kind: input, shape index: {}]
  %s4 = inlined_call_operand.vmem [shape: f32[1,16], index: 4, kind: input, shape index: {}]
  %s5 = inlined_call_operand.vmem [shape: f32[1,16], index: 5, kind: input, shape index: {}]
  %s6 = inlined_call_operand.<no memory space> [shape: f32[1,1], index: 6, kind: input, shape index: {}]
  %s7 = inlined_call_operand.vmem [shape: f32[1,8], index: 7, kind: output, shape index: {}]
  %s8 = sld [smem:[#allocation0]]
  $region38: #{net_forward.1} parent=0
    _
  %s10 = ssub.s32 1, %s8
  %s11 = scalar_select 0, %s10, %s8
  %v12 = vstv %s6
  %13 = vst [vmem:[#allocation2] sm:$0x1] %v12
  // Predicated region
  $region2: #{net_forward.1} parent=0 // pred_check
    _
  $region3: #{net_forward.1} parent=0 // pred_check_branch
    %15 = sbr.rel (0) target = $region5
  $region4: #{net_forward.1} parent=0 // pred_region
    _
  $region5: #{net_forward.1} parent=0 // pred_fallthru
    _
  // Predicated region
  $region6: #{net_forward.1} parent=0 // pred_check
    _
  $region7: #{net_forward.1} parent=0 // pred_check_branch
    %17 = sbr.rel (0) target = $region9
  $region8: #{net_forward.1} parent=0 // pred_region
    _
  $region9: #{net_forward.1} parent=0 // pred_fallthru
    _
  // Predicated region
  $region10: #{net_forward.1} parent=0 // pred_check
    _
  $region11: #{net_forward.1} parent=0 // pred_check_branch
    %19 = sbr.rel (0) target = $region13
  $region12: #{net_forward.1} parent=0 // pred_region
    _
  $region13: #{net_forward.1} parent=0 // pred_fallthru
    _
  // Predicated region
  $region14: #{net_forward.1} parent=0 // pred_check
    _
  $region15: #{net_forward.1} parent=0 // pred_check_branch
    %21 = sbr.rel (0) target = $region17
  $region16: #{net_forward.1} parent=0 // pred_region
    _
  $region17: #{net_forward.1} parent=0 // pred_fallthru
    _
  // Predicated region
  $region18: #{net_forward.1} parent=0 // pred_check
    _
  $region19: #{net_forward.1} parent=0 // pred_check_branch
    %23 = sbr.rel (0) target = $region21
  $region20: #{net_forward.1} parent=0 // pred_region
    _
  $region21: #{net_forward.1} parent=0 // pred_fallthru
    _
  // Predicated region
  $region22: #{net_forward.1} parent=0 // pred_check
    _
  $region23: #{net_forward.1} parent=0 // pred_check_branch
    %25 = sbr.rel (0) target = $region25
  $region24: #{net_forward.1} parent=0 // pred_region
    _
  $region25: #{net_forward.1} parent=0 // pred_fallthru
    _
  // Predicated region
  $region26: #{net_forward.1} parent=0 // pred_check
    _
  $region27: #{net_forward.1} parent=0 // pred_check_branch
    %27 = sbr.rel (0) target = $region29
  $region28: #{net_forward.1} parent=0 // pred_region
    _
  $region29: #{net_forward.1} parent=0 // pred_fallthru
    _
  %v29 = vld [vmem:[%s0] sm:$0xff]
  %v30 = vld [vmem:[%s0 + $0x8] sm:$0xff]
  %v31 = vld [vmem:[%s0 + $0x10] sm:$0xff]
  %v32 = vld [vmem:[%s0 + $0x18] sm:$0xff]
  %v33 = vld [vmem:[%s0 + $0x20] sm:$0xff]
  %v34 = vld [vmem:[%s0 + $0x28] sm:$0xff]
  %v35 = vld [vmem:[%s0 + $0x30] sm:$0xff]
  %v36 = vld [vmem:[%s0 + $0x38] sm:$0xff]
  %v37 = vld [vmem:[%s1] sm:$0xf]
  %v38 = vld [vmem:[%s1 + $0x4] sm:$0xf]
  %v39 = vld [vmem:[%s1 + $0x8] sm:$0xf]
  %v40 = vld [vmem:[%s1 + $0xc] sm:$0xf]
  %v41 = vld [vmem:[%s1 + $0x10] sm:$0xf]
  %v42 = vld [vmem:[%s1 + $0x14] sm:$0xf]
  %v43 = vld [vmem:[%s1 + $0x18] sm:$0xf]
  %v44 = vld [vmem:[%s1 + $0x1c] sm:$0xf]
  %v45 = vld [vmem:[%s1 + $0x20] sm:$0xf]
  %v46 = vld [vmem:[%s1 + $0x24] sm:$0xf]
  %v47 = vld [vmem:[%s1 + $0x28] sm:$0xf]
  %v48 = vld [vmem:[%s1 + $0x2c] sm:$0xf]
  %v49 = vld [vmem:[%s1 + $0x30] sm:$0xf]
  %v50 = vld [vmem:[%s1 + $0x34] sm:$0xf]
  %v51 = vld [vmem:[%s1 + $0x38] sm:$0xf]
  %v52 = vld [vmem:[%s1 + $0x3c] sm:$0xf]
  %v53 = vld [vmem:[%s1 + $0x40] sm:$0xf]
  %v54 = vld [vmem:[%s1 + $0x44] sm:$0xf]
  %v55 = vld [vmem:[%s1 + $0x48] sm:$0xf]
  %v56 = vld [vmem:[%s1 + $0x4c] sm:$0xf]
  %v57 = vld [vmem:[%s1 + $0x50] sm:$0xf]
  %v58 = vld [vmem:[%s1 + $0x54] sm:$0xf]
  %v59 = vld [vmem:[%s1 + $0x58] sm:$0xf]
  %v60 = vld [vmem:[%s1 + $0x5c] sm:$0xf]
  %v61 = vld [vmem:[%s1 + $0x60] sm:$0xf]
  %v62 = vld [vmem:[%s1 + $0x64] sm:$0xf]
  %v63 = vld [vmem:[%s1 + $0x68] sm:$0xf]
  %v64 = vld [vmem:[%s1 + $0x6c] sm:$0xf]
  %v65 = vld [vmem:[%s1 + $0x70] sm:$0xf]
  %v66 = vld [vmem:[%s1 + $0x74] sm:$0xf]
  %v67 = vld [vmem:[%s1 + $0x78] sm:$0xf]
  %v68 = vld [vmem:[%s1 + $0x7c] sm:$0xf]
  %v69 = vld [vmem:[%s1 + $0x80] sm:$0xf]
  %v70 = vld [vmem:[%s1 + $0x84] sm:$0xf]
  %v71 = vld [vmem:[%s1 + $0x88] sm:$0xf]
  %v72 = vld [vmem:[%s1 + $0x8c] sm:$0xf]
  %v73 = vld [vmem:[%s1 + $0x90] sm:$0xf]
  %v74 = vld [vmem:[%s1 + $0x94] sm:$0xf]
  %v75 = vld [vmem:[%s1 + $0x98] sm:$0xf]
  %v76 = vld [vmem:[%s1 + $0x9c] sm:$0xf]
  %v77 = vld [vmem:[%s1 + $0xa0] sm:$0xf]
  %v78 = vld [vmem:[%s1 + $0xa4] sm:$0xf]
  %v79 = vld [vmem:[%s1 + $0xa8] sm:$0xf]
  %v80 = vld [vmem:[%s1 + $0xac] sm:$0xf]
  %v81 = vld [vmem:[%s1 + $0xb0] sm:$0xf]
  %v82 = vld [vmem:[%s1 + $0xb4] sm:$0xf]
  %v83 = vld [vmem:[%s1 + $0xb8] sm:$0xf]
  %v84 = vld [vmem:[%s1 + $0xbc] sm:$0xf]
  %v85 = vld [vmem:[%s1 + $0xc0] sm:$0xf]
  %v86 = vld [vmem:[%s1 + $0xc4] sm:$0xf]
  %v87 = vld [vmem:[%s1 + $0xc8] sm:$0xf]
  %v88 = vld [vmem:[%s1 + $0xcc] sm:$0xf]
  %v89 = vld [vmem:[%s1 + $0xd0] sm:$0xf]
  %v90 = vld [vmem:[%s1 + $0xd4] sm:$0xf]
  %v91 = vld [vmem:[%s1 + $0xd8] sm:$0xf]
  %v92 = vld [vmem:[%s1 + $0xdc] sm:$0xf]
  %v93 = vld [vmem:[%s1 + $0xe0] sm:$0xf]
  %v94 = vld [vmem:[%s1 + $0xe4] sm:$0xf]
  %v95 = vld [vmem:[%s1 + $0xe8] sm:$0xf]
  %v96 = vld [vmem:[%s1 + $0xec] sm:$0xf]
  %v97 = vld [vmem:[%s1 + $0xf0] sm:$0xf]
  %v98 = vld [vmem:[%s1 + $0xf4] sm:$0xf]
  %v99 = vld [vmem:[%s1 + $0xf8] sm:$0xf]
  %v100 = vld [vmem:[%s1 + $0xfc] sm:$0xf]
  %v101 = vld [vmem:[%s1 + $0x100] sm:$0xf]
  %v102 = vld [vmem:[%s1 + $0x104] sm:$0xf]
  %v103 = vld [vmem:[%s1 + $0x108] sm:$0xf]
  %v104 = vld [vmem:[%s1 + $0x10c] sm:$0xf]
  %v105 = vld [vmem:[%s1 + $0x110] sm:$0xf]
  %v106 = vld [vmem:[%s1 + $0x114] sm:$0xf]
  %v107 = vld [vmem:[%s1 + $0x118] sm:$0xf]
  %v108 = vld [vmem:[%s1 + $0x11c] sm:$0xf]
  %v109 = vld [vmem:[%s1 + $0x120] sm:$0xf]
  %v110 = vld [vmem:[%s1 + $0x124] sm:$0xf]
  %v111 = vld [vmem:[%s1 + $0x128] sm:$0xf]
  %v112 = vld [vmem:[%s1 + $0x12c] sm:$0xf]
  %v113 = vld [vmem:[%s1 + $0x130] sm:$0xf]
  %v114 = vld [vmem:[%s1 + $0x134] sm:$0xf]
  %v115 = vld [vmem:[%s1 + $0x138] sm:$0xf]
  %v116 = vld [vmem:[%s1 + $0x13c] sm:$0xf]
  %v117 = vld [vmem:[%s1 + $0x140] sm:$0xf]
  %v118 = vld [vmem:[%s1 + $0x144] sm:$0xf]
  %v119 = vld [vmem:[%s1 + $0x148] sm:$0xf]
  %v120 = vld [vmem:[%s1 + $0x14c] sm:$0xf]
  %v121 = vld [vmem:[%s1 + $0x150] sm:$0xf]
  %v122 = vld [vmem:[%s1 + $0x154] sm:$0xf]
  %v123 = vld [vmem:[%s1 + $0x158] sm:$0xf]
  %v124 = vld [vmem:[%s1 + $0x15c] sm:$0xf]
  %v125 = vld [vmem:[%s1 + $0x160] sm:$0xf]
  %v126 = vld [vmem:[%s1 + $0x164] sm:$0xf]
  %v127 = vld [vmem:[%s1 + $0x168] sm:$0xf]
  %v128 = vld [vmem:[%s1 + $0x16c] sm:$0xf]
  %v129 = vld [vmem:[%s1 + $0x170] sm:$0xf]
  %v130 = vld [vmem:[%s1 + $0x174] sm:$0xf]
  %v131 = vld [vmem:[%s1 + $0x178] sm:$0xf]
  %v132 = vld [vmem:[%s1 + $0x17c] sm:$0xf]
  %v133 = vld [vmem:[%s1 + $0x180] sm:$0xf]
  %v134 = vld [vmem:[%s1 + $0x184] sm:$0xf]
  %v135 = vld [vmem:[%s1 + $0x188] sm:$0xf]
  %v136 = vld [vmem:[%s1 + $0x18c] sm:$0xf]
  %v137 = vld [vmem:[%s1 + $0x190] sm:$0xf]
  %v138 = vld [vmem:[%s1 + $0x194] sm:$0xf]
  %v139 = vld [vmem:[%s1 + $0x198] sm:$0xf]
  %v140 = vld [vmem:[%s1 + $0x19c] sm:$0xf]
  %v141 = vld [vmem:[%s1 + $0x1a0] sm:$0xf]
  %v142 = vld [vmem:[%s1 + $0x1a4] sm:$0xf]
  %v143 = vld [vmem:[%s1 + $0x1a8] sm:$0xf]
  %v144 = vld [vmem:[%s1 + $0x1ac] sm:$0xf]
  %v145 = vld [vmem:[%s1 + $0x1b0] sm:$0xf]
  %v146 = vld [vmem:[%s1 + $0x1b4] sm:$0xf]
  %v147 = vld [vmem:[%s1 + $0x1b8] sm:$0xf]
  %v148 = vld [vmem:[%s1 + $0x1bc] sm:$0xf]
  %v149 = vld [vmem:[%s1 + $0x1c0] sm:$0xf]
  %v150 = vld [vmem:[%s1 + $0x1c4] sm:$0xf]
  %v151 = vld [vmem:[%s1 + $0x1c8] sm:$0xf]
  %v152 = vld [vmem:[%s1 + $0x1cc] sm:$0xf]
  %v153 = vld [vmem:[%s1 + $0x1d0] sm:$0xf]
  %v154 = vld [vmem:[%s1 + $0x1d4] sm:$0xf]
  %v155 = vld [vmem:[%s1 + $0x1d8] sm:$0xf]
  %v156 = vld [vmem:[%s1 + $0x1dc] sm:$0xf]
  %v157 = vld [vmem:[%s1 + $0x1e0] sm:$0xf]
  %v158 = vld [vmem:[%s1 + $0x1e4] sm:$0xf]
  %v159 = vld [vmem:[%s1 + $0x1e8] sm:$0xf]
  %v160 = vld [vmem:[%s1 + $0x1ec] sm:$0xf]
  %v161 = vld [vmem:[%s1 + $0x1f0] sm:$0xf]
  %v162 = vld [vmem:[%s1 + $0x1f4] sm:$0xf]
  %v163 = vld [vmem:[%s1 + $0x1f8] sm:$0xf]
  %v164 = vld [vmem:[%s1 + $0x1fc] sm:$0xf]
  %v165 = vld [vmem:[%s1 + $0x200] sm:$0xf]
  %v166 = vld [vmem:[%s1 + $0x204] sm:$0xf]
  %v167 = vld [vmem:[%s1 + $0x208] sm:$0xf]
  %v168 = vld [vmem:[%s1 + $0x20c] sm:$0xf]
  %v169 = vld [vmem:[%s1 + $0x210] sm:$0xf]
  %v170 = vld [vmem:[%s1 + $0x214] sm:$0xf]
  %v171 = vld [vmem:[%s1 + $0x218] sm:$0xf]
  %v172 = vld [vmem:[%s1 + $0x21c] sm:$0xf]
  %v173 = vld [vmem:[%s1 + $0x220] sm:$0xf]
  %v174 = vld [vmem:[%s1 + $0x224] sm:$0xf]
  %v175 = vld [vmem:[%s1 + $0x228] sm:$0xf]
  %v176 = vld [vmem:[%s1 + $0x22c] sm:$0xf]
  %v177 = vld [vmem:[%s1 + $0x230] sm:$0xf]
  %v178 = vld [vmem:[%s1 + $0x234] sm:$0xf]
  %v179 = vld [vmem:[%s1 + $0x238] sm:$0xf]
  %v180 = vld [vmem:[%s1 + $0x23c] sm:$0xf]
  %v181 = vld [vmem:[%s1 + $0x240] sm:$0xf]
  %v182 = vld [vmem:[%s1 + $0x244] sm:$0xf]
  %v183 = vld [vmem:[%s1 + $0x248] sm:$0xf]
  %v184 = vld [vmem:[%s1 + $0x24c] sm:$0xf]
  %v185 = vld [vmem:[%s1 + $0x250] sm:$0xf]
  %v186 = vld [vmem:[%s1 + $0x254] sm:$0xf]
  %v187 = vld [vmem:[%s1 + $0x258] sm:$0xf]
  %v188 = vld [vmem:[%s1 + $0x25c] sm:$0xf]
  %v189 = vld [vmem:[%s1 + $0x260] sm:$0xf]
  %v190 = vld [vmem:[%s1 + $0x264] sm:$0xf]
  %v191 = vld [vmem:[%s1 + $0x268] sm:$0xf]
  %v192 = vld [vmem:[%s1 + $0x26c] sm:$0xf]
  %v193 = vld [vmem:[%s1 + $0x270] sm:$0xf]
  %v194 = vld [vmem:[%s1 + $0x274] sm:$0xf]
  %v195 = vld [vmem:[%s1 + $0x278] sm:$0xf]
  %v196 = vld [vmem:[%s1 + $0x27c] sm:$0xf]
  %v197 = vld [vmem:[%s1 + $0x280] sm:$0xf]
  %v198 = vld [vmem:[%s1 + $0x284] sm:$0xf]
  %v199 = vld [vmem:[%s1 + $0x288] sm:$0xf]
  %v200 = vld [vmem:[%s1 + $0x28c] sm:$0xf]
  %v201 = vld [vmem:[%s1 + $0x290] sm:$0xf]
  %v202 = vld [vmem:[%s1 + $0x294] sm:$0xf]
  %v203 = vld [vmem:[%s1 + $0x298] sm:$0xf]
  %v204 = vld [vmem:[%s1 + $0x29c] sm:$0xf]
  %v205 = vld [vmem:[%s1 + $0x2a0] sm:$0xf]
  %v206 = vld [vmem:[%s1 + $0x2a4] sm:$0xf]
  %v207 = vld [vmem:[%s1 + $0x2a8] sm:$0xf]
  %v208 = vld [vmem:[%s1 + $0x2ac] sm:$0xf]
  %v209 = vld [vmem:[%s1 + $0x2b0] sm:$0xf]
  %v210 = vld [vmem:[%s1 + $0x2b4] sm:$0xf]
  %v211 = vld [vmem:[%s1 + $0x2b8] sm:$0xf]
  %v212 = vld [vmem:[%s1 + $0x2bc] sm:$0xf]
  %v213 = vld [vmem:[%s1 + $0x2c0] sm:$0xf]
  %v214 = vld [vmem:[%s1 + $0x2c4] sm:$0xf]
  %v215 = vld [vmem:[%s1 + $0x2c8] sm:$0xf]
  %v216 = vld [vmem:[%s1 + $0x2cc] sm:$0xf]
  %v217 = vld [vmem:[%s1 + $0x2d0] sm:$0xf]
  %v218 = vld [vmem:[%s1 + $0x2d4] sm:$0xf]
  %v219 = vld [vmem:[%s1 + $0x2d8] sm:$0xf]
  %v220 = vld [vmem:[%s1 + $0x2dc] sm:$0xf]
  %v221 = vld [vmem:[%s1 + $0x2e0] sm:$0xf]
  %v222 = vld [vmem:[%s1 + $0x2e4] sm:$0xf]
  %v223 = vld [vmem:[%s1 + $0x2e8] sm:$0xf]
  %v224 = vld [vmem:[%s1 + $0x2ec] sm:$0xf]
  %v225 = vld [vmem:[%s1 + $0x2f0] sm:$0xf]
  %v226 = vld [vmem:[%s1 + $0x2f4] sm:$0xf]
  %v227 = vld [vmem:[%s1 + $0x2f8] sm:$0xf]
  %v228 = vld [vmem:[%s1 + $0x2fc] sm:$0xf]
  %v229 = vld [vmem:[%s1 + $0x300] sm:$0xf]
  %v230 = vld [vmem:[%s1 + $0x304] sm:$0xf]
  %v231 = vld [vmem:[%s1 + $0x308] sm:$0xf]
  %v232 = vld [vmem:[%s1 + $0x30c] sm:$0xf]
  %v233 = vld [vmem:[%s1 + $0x310] sm:$0xf]
  %v234 = vld [vmem:[%s1 + $0x314] sm:$0xf]
  %v235 = vld [vmem:[%s1 + $0x318] sm:$0xf]
  %v236 = vld [vmem:[%s1 + $0x31c] sm:$0xf]
  %v237 = vld [vmem:[%s1 + $0x320] sm:$0xf]
  %v238 = vld [vmem:[%s1 + $0x324] sm:$0xf]
  %v239 = vld [vmem:[%s1 + $0x328] sm:$0xf]
  %v240 = vld [vmem:[%s1 + $0x32c] sm:$0xf]
  %v241 = vld [vmem:[%s1 + $0x330] sm:$0xf]
  %v242 = vld [vmem:[%s1 + $0x334] sm:$0xf]
  %v243 = vld [vmem:[%s1 + $0x338] sm:$0xf]
  %v244 = vld [vmem:[%s1 + $0x33c] sm:$0xf]
  %v245 = vld [vmem:[%s1 + $0x340] sm:$0xf]
  %v246 = vld [vmem:[%s1 + $0x344] sm:$0xf]
  %v247 = vld [vmem:[%s1 + $0x348] sm:$0xf]
  %v248 = vld [vmem:[%s1 + $0x34c] sm:$0xf]
  %v249 = vld [vmem:[%s1 + $0x350] sm:$0xf]
  %v250 = vld [vmem:[%s1 + $0x354] sm:$0xf]
  %v251 = vld [vmem:[%s1 + $0x358] sm:$0xf]
  %v252 = vld [vmem:[%s1 + $0x35c] sm:$0xf]
  %v253 = vld [vmem:[%s1 + $0x360] sm:$0xf]
  %v254 = vld [vmem:[%s1 + $0x364] sm:$0xf]
  %v255 = vld [vmem:[%s1 + $0x368] sm:$0xf]
  %v256 = vld [vmem:[%s1 + $0x36c] sm:$0xf]
  %v257 = vld [vmem:[%s1 + $0x370] sm:$0xf]
  %v258 = vld [vmem:[%s1 + $0x374] sm:$0xf]
  %v259 = vld [vmem:[%s1 + $0x378] sm:$0xf]
  %v260 = vld [vmem:[%s1 + $0x37c] sm:$0xf]
  %v261 = vld [vmem:[%s1 + $0x380] sm:$0xf]
  %v262 = vld [vmem:[%s1 + $0x384] sm:$0xf]
  %v263 = vld [vmem:[%s1 + $0x388] sm:$0xf]
  %v264 = vld [vmem:[%s1 + $0x38c] sm:$0xf]
  %v265 = vld [vmem:[%s1 + $0x390] sm:$0xf]
  %v266 = vld [vmem:[%s1 + $0x394] sm:$0xf]
  %v267 = vld [vmem:[%s1 + $0x398] sm:$0xf]
  %v268 = vld [vmem:[%s1 + $0x39c] sm:$0xf]
  %v269 = vld [vmem:[%s1 + $0x3a0] sm:$0xf]
  %v270 = vld [vmem:[%s1 + $0x3a4] sm:$0xf]
  %v271 = vld [vmem:[%s1 + $0x3a8] sm:$0xf]
  %v272 = vld [vmem:[%s1 + $0x3ac] sm:$0xf]
  %v273 = vld [vmem:[%s1 + $0x3b0] sm:$0xf]
  %v274 = vld [vmem:[%s1 + $0x3b4] sm:$0xf]
  %v275 = vld [vmem:[%s1 + $0x3b8] sm:$0xf]
  %v276 = vld [vmem:[%s1 + $0x3bc] sm:$0xf]
  %v277 = vld [vmem:[%s1 + $0x3c0] sm:$0xf]
  %v278 = vld [vmem:[%s1 + $0x3c4] sm:$0xf]
  %v279 = vld [vmem:[%s1 + $0x3c8] sm:$0xf]
  %v280 = vld [vmem:[%s1 + $0x3cc] sm:$0xf]
  %v281 = vld [vmem:[%s1 + $0x3d0] sm:$0xf]
  %v282 = vld [vmem:[%s1 + $0x3d4] sm:$0xf]
  %v283 = vld [vmem:[%s1 + $0x3d8] sm:$0xf]
  %v284 = vld [vmem:[%s1 + $0x3dc] sm:$0xf]
  %v285 = vld [vmem:[%s1 + $0x3e0] sm:$0xf]
  %v286 = vld [vmem:[%s1 + $0x3e4] sm:$0xf]
  %v287 = vld [vmem:[%s1 + $0x3e8] sm:$0xf]
  %v288 = vld [vmem:[%s1 + $0x3ec] sm:$0xf]
  %v289 = vld [vmem:[%s1 + $0x3f0] sm:$0xf]
  %v290 = vld [vmem:[%s1 + $0x3f4] sm:$0xf]
  %v291 = vld [vmem:[%s1 + $0x3f8] sm:$0xf]
  %v292 = vld [vmem:[%s1 + $0x3fc] sm:$0xf]
  %v293 = vld [vmem:[%s2] sm:$0x1]
  %v295 = vlaneseq
  %v296 = vshrl.u32 %v295, 7
  %v297 = vsub.s32 0, %v296
  %v298 = vrot.slane %v293, %v297
  %v308 = vunpack.c.l.b16 %v29
  %v309 = vunpack.c.h.b16 %v29
  %v310 = vunpack.c.l.b16 %v30
  %v311 = vunpack.c.h.b16 %v30
  %v312 = vunpack.c.l.b16 %v31
  %v313 = vunpack.c.h.b16 %v31
  %v314 = vunpack.c.l.b16 %v32
  %v315 = vunpack.c.h.b16 %v32
  %v316 = vunpack.c.l.b16 %v33
  %v317 = vunpack.c.h.b16 %v33
  %v318 = vunpack.c.l.b16 %v34
  %v319 = vunpack.c.h.b16 %v34
  %v320 = vunpack.c.l.b16 %v35
  %v321 = vunpack.c.h.b16 %v35
  %v322 = vunpack.c.l.b16 %v36
  %v323 = vunpack.c.h.b16 %v36
  %v324 = vpack.c.b16 %v308, %v308
  %v325 = vpack.c.b16 %v309, %v309
  %v326 = vpack.c.b16 %v310, %v310
  %v327 = vpack.c.b16 %v311, %v311
  %v328 = vpack.c.b16 %v312, %v312
  %v329 = vpack.c.b16 %v313, %v313
  %v330 = vpack.c.b16 %v314, %v314
  %v331 = vpack.c.b16 %v315, %v315
  %v332 = vpack.c.b16 %v316, %v316
  %v333 = vpack.c.b16 %v317, %v317
  %v334 = vpack.c.b16 %v318, %v318
  %v335 = vpack.c.b16 %v319, %v319
  %v336 = vpack.c.b16 %v320, %v320
  %v337 = vpack.c.b16 %v321, %v321
  %v338 = vpack.c.b16 %v322, %v322
  %v339 = vpack.c.b16 %v323, %v323
  %v612 = vunpack.c.l.b16 %v37
  %v613 = vunpack.c.l.b16 %v38
  %v614 = vunpack.c.l.b16 %v39
  %v615 = vunpack.c.l.b16 %v40
  %v616 = vunpack.c.l.b16 %v41
  %v617 = vunpack.c.l.b16 %v42
  %v618 = vunpack.c.l.b16 %v43
  %v619 = vunpack.c.l.b16 %v44
  %v620 = vunpack.c.l.b16 %v45
  %v621 = vunpack.c.l.b16 %v46
  %v622 = vunpack.c.l.b16 %v47
  %v623 = vunpack.c.l.b16 %v48
  %v624 = vunpack.c.l.b16 %v49
  %v625 = vunpack.c.l.b16 %v50
  %v626 = vunpack.c.l.b16 %v51
  %v627 = vunpack.c.l.b16 %v52
  %v628 = vunpack.c.l.b16 %v53
  %v629 = vunpack.c.l.b16 %v54
  %v630 = vunpack.c.l.b16 %v55
  %v631 = vunpack.c.l.b16 %v56
  %v632 = vunpack.c.l.b16 %v57
  %v633 = vunpack.c.l.b16 %v58
  %v634 = vunpack.c.l.b16 %v59
  %v635 = vunpack.c.l.b16 %v60
  %v636 = vunpack.c.l.b16 %v61
  %v637 = vunpack.c.l.b16 %v62
  %v638 = vunpack.c.l.b16 %v63
  %v639 = vunpack.c.l.b16 %v64
  %v640 = vunpack.c.l.b16 %v65
  %v641 = vunpack.c.l.b16 %v66
  %v642 = vunpack.c.l.b16 %v67
  %v643 = vunpack.c.l.b16 %v68
  %v644 = vunpack.c.l.b16 %v69
  %v645 = vunpack.c.l.b16 %v70
  %v646 = vunpack.c.l.b16 %v71
  %v647 = vunpack.c.l.b16 %v72
  %v648 = vunpack.c.l.b16 %v73
  %v649 = vunpack.c.l.b16 %v74
  %v650 = vunpack.c.l.b16 %v75
  %v651 = vunpack.c.l.b16 %v76
  %v652 = vunpack.c.l.b16 %v77
  %v653 = vunpack.c.l.b16 %v78
  %v654 = vunpack.c.l.b16 %v79
  %v655 = vunpack.c.l.b16 %v80
  %v656 = vunpack.c.l.b16 %v81
  %v657 = vunpack.c.l.b16 %v82
  %v658 = vunpack.c.l.b16 %v83
  %v659 = vunpack.c.l.b16 %v84
  %v660 = vunpack.c.l.b16 %v85
  %v661 = vunpack.c.l.b16 %v86
  %v662 = vunpack.c.l.b16 %v87
  %v663 = vunpack.c.l.b16 %v88
  %v664 = vunpack.c.l.b16 %v89
  %v665 = vunpack.c.l.b16 %v90
  %v666 = vunpack.c.l.b16 %v91
  %v667 = vunpack.c.l.b16 %v92
  %v668 = vunpack.c.l.b16 %v93
  %v669 = vunpack.c.l.b16 %v94
  %v670 = vunpack.c.l.b16 %v95
  %v671 = vunpack.c.l.b16 %v96
  %v672 = vunpack.c.l.b16 %v97
  %v673 = vunpack.c.l.b16 %v98
  %v674 = vunpack.c.l.b16 %v99
  %v675 = vunpack.c.l.b16 %v100
  %v676 = vunpack.c.l.b16 %v101
  %v677 = vunpack.c.l.b16 %v102
  %v678 = vunpack.c.l.b16 %v103
  %v679 = vunpack.c.l.b16 %v104
  %v680 = vunpack.c.l.b16 %v105
  %v681 = vunpack.c.l.b16 %v106
  %v682 = vunpack.c.l.b16 %v107
  %v683 = vunpack.c.l.b16 %v108
  %v684 = vunpack.c.l.b16 %v109
  %v685 = vunpack.c.l.b16 %v110
  %v686 = vunpack.c.l.b16 %v111
  %v687 = vunpack.c.l.b16 %v112
  %v688 = vunpack.c.l.b16 %v113
  %v689 = vunpack.c.l.b16 %v114
  %v690 = vunpack.c.l.b16 %v115
  %v691 = vunpack.c.l.b16 %v116
  %v692 = vunpack.c.l.b16 %v117
  %v693 = vunpack.c.l.b16 %v118
  %v694 = vunpack.c.l.b16 %v119
  %v695 = vunpack.c.l.b16 %v120
  %v696 = vunpack.c.l.b16 %v121
  %v697 = vunpack.c.l.b16 %v122
  %v698 = vunpack.c.l.b16 %v123
  %v699 = vunpack.c.l.b16 %v124
  %v700 = vunpack.c.l.b16 %v125
  %v701 = vunpack.c.l.b16 %v126
  %v702 = vunpack.c.l.b16 %v127
  %v703 = vunpack.c.l.b16 %v128
  %v704 = vunpack.c.l.b16 %v129
  %v705 = vunpack.c.l.b16 %v130
  %v706 = vunpack.c.l.b16 %v131
  %v707 = vunpack.c.l.b16 %v132
  %v708 = vunpack.c.l.b16 %v133
  %v709 = vunpack.c.l.b16 %v134
  %v710 = vunpack.c.l.b16 %v135
  %v711 = vunpack.c.l.b16 %v136
  %v712 = vunpack.c.l.b16 %v137
  %v713 = vunpack.c.l.b16 %v138
  %v714 = vunpack.c.l.b16 %v139
  %v715 = vunpack.c.l.b16 %v140
  %v716 = vunpack.c.l.b16 %v141
  %v717 = vunpack.c.l.b16 %v142
  %v718 = vunpack.c.l.b16 %v143
  %v719 = vunpack.c.l.b16 %v144
  %v720 = vunpack.c.l.b16 %v145
  %v721 = vunpack.c.l.b16 %v146
  %v722 = vunpack.c.l.b16 %v147
  %v723 = vunpack.c.l.b16 %v148
  %v724 = vunpack.c.l.b16 %v149
  %v725 = vunpack.c.l.b16 %v150
  %v726 = vunpack.c.l.b16 %v151
  %v727 = vunpack.c.l.b16 %v152
  %v728 = vunpack.c.l.b16 %v153
  %v729 = vunpack.c.l.b16 %v154
  %v730 = vunpack.c.l.b16 %v155
  %v731 = vunpack.c.l.b16 %v156
  %v732 = vunpack.c.l.b16 %v157
  %v733 = vunpack.c.l.b16 %v158
  %v734 = vunpack.c.l.b16 %v159
  %v735 = vunpack.c.l.b16 %v160
  %v736 = vunpack.c.l.b16 %v161
  %v737 = vunpack.c.l.b16 %v162
  %v738 = vunpack.c.l.b16 %v163
  %v739 = vunpack.c.l.b16 %v164
  %v740 = vunpack.c.l.b16 %v165
  %v741 = vunpack.c.l.b16 %v166
  %v742 = vunpack.c.l.b16 %v167
  %v743 = vunpack.c.l.b16 %v168
  %v744 = vunpack.c.l.b16 %v169
  %v745 = vunpack.c.l.b16 %v170
  %v746 = vunpack.c.l.b16 %v171
  %v747 = vunpack.c.l.b16 %v172
  %v748 = vunpack.c.l.b16 %v173
  %v749 = vunpack.c.l.b16 %v174
  %v750 = vunpack.c.l.b16 %v175
  %v751 = vunpack.c.l.b16 %v176
  %v752 = vunpack.c.l.b16 %v177
  %v753 = vunpack.c.l.b16 %v178
  %v754 = vunpack.c.l.b16 %v179
  %v755 = vunpack.c.l.b16 %v180
  %v756 = vunpack.c.l.b16 %v181
  %v757 = vunpack.c.l.b16 %v182
  %v758 = vunpack.c.l.b16 %v183
  %v759 = vunpack.c.l.b16 %v184
  %v760 = vunpack.c.l.b16 %v185
  %v761 = vunpack.c.l.b16 %v186
  %v762 = vunpack.c.l.b16 %v187
  %v763 = vunpack.c.l.b16 %v188
  %v764 = vunpack.c.l.b16 %v189
  %v765 = vunpack.c.l.b16 %v190
  %v766 = vunpack.c.l.b16 %v191
  %v767 = vunpack.c.l.b16 %v192
  %v768 = vunpack.c.l.b16 %v193
  %v769 = vunpack.c.l.b16 %v194
  %v770 = vunpack.c.l.b16 %v195
  %v771 = vunpack.c.l.b16 %v196
  %v772 = vunpack.c.l.b16 %v197
  %v773 = vunpack.c.l.b16 %v198
  %v774 = vunpack.c.l.b16 %v199
  %v775 = vunpack.c.l.b16 %v200
  %v776 = vunpack.c.l.b16 %v201
  %v777 = vunpack.c.l.b16 %v202
  %v778 = vunpack.c.l.b16 %v203
  %v779 = vunpack.c.l.b16 %v204
  %v780 = vunpack.c.l.b16 %v205
  %v781 = vunpack.c.l.b16 %v206
  %v782 = vunpack.c.l.b16 %v207
  %v783 = vunpack.c.l.b16 %v208
  %v784 = vunpack.c.l.b16 %v209
  %v785 = vunpack.c.l.b16 %v210
  %v786 = vunpack.c.l.b16 %v211
  %v787 = vunpack.c.l.b16 %v212
  %v788 = vunpack.c.l.b16 %v213
  %v789 = vunpack.c.l.b16 %v214
  %v790 = vunpack.c.l.b16 %v215
  %v791 = vunpack.c.l.b16 %v216
  %v792 = vunpack.c.l.b16 %v217
  %v793 = vunpack.c.l.b16 %v218
  %v794 = vunpack.c.l.b16 %v219
  %v795 = vunpack.c.l.b16 %v220
  %v796 = vunpack.c.l.b16 %v221
  %v797 = vunpack.c.l.b16 %v222
  %v798 = vunpack.c.l.b16 %v223
  %v799 = vunpack.c.l.b16 %v224
  %v800 = vunpack.c.l.b16 %v225
  %v801 = vunpack.c.l.b16 %v226
  %v802 = vunpack.c.l.b16 %v227
  %v803 = vunpack.c.l.b16 %v228
  %v804 = vunpack.c.l.b16 %v229
  %v805 = vunpack.c.l.b16 %v230
  %v806 = vunpack.c.l.b16 %v231
  %v807 = vunpack.c.l.b16 %v232
  %v808 = vunpack.c.l.b16 %v233
  %v809 = vunpack.c.l.b16 %v234
  %v810 = vunpack.c.l.b16 %v235
  %v811 = vunpack.c.l.b16 %v236
  %v812 = vunpack.c.l.b16 %v237
  %v813 = vunpack.c.l.b16 %v238
  %v814 = vunpack.c.l.b16 %v239
  %v815 = vunpack.c.l.b16 %v240
  %v816 = vunpack.c.l.b16 %v241
  %v817 = vunpack.c.l.b16 %v242
  %v818 = vunpack.c.l.b16 %v243
  %v819 = vunpack.c.l.b16 %v244
  %v820 = vunpack.c.l.b16 %v245
  %v821 = vunpack.c.l.b16 %v246
  %v822 = vunpack.c.l.b16 %v247
  %v823 = vunpack.c.l.b16 %v248
  %v824 = vunpack.c.l.b16 %v249
  %v825 = vunpack.c.l.b16 %v250
  %v826 = vunpack.c.l.b16 %v251
  %v827 = vunpack.c.l.b16 %v252
  %v828 = vunpack.c.l.b16 %v253
  %v829 = vunpack.c.l.b16 %v254
  %v830 = vunpack.c.l.b16 %v255
  %v831 = vunpack.c.l.b16 %v256
  %v832 = vunpack.c.l.b16 %v257
  %v833 = vunpack.c.l.b16 %v258
  %v834 = vunpack.c.l.b16 %v259
  %v835 = vunpack.c.l.b16 %v260
  %v836 = vunpack.c.l.b16 %v261
  %v837 = vunpack.c.l.b16 %v262
  %v838 = vunpack.c.l.b16 %v263
  %v839 = vunpack.c.l.b16 %v264
  %v840 = vunpack.c.l.b16 %v265
  %v841 = vunpack.c.l.b16 %v266
  %v842 = vunpack.c.l.b16 %v267
  %v843 = vunpack.c.l.b16 %v268
  %v844 = vunpack.c.l.b16 %v269
  %v845 = vunpack.c.l.b16 %v270
  %v846 = vunpack.c.l.b16 %v271
  %v847 = vunpack.c.l.b16 %v272
  %v848 = vunpack.c.l.b16 %v273
  %v849 = vunpack.c.l.b16 %v274
  %v850 = vunpack.c.l.b16 %v275
  %v851 = vunpack.c.l.b16 %v276
  %v852 = vunpack.c.l.b16 %v277
  %v853 = vunpack.c.l.b16 %v278
  %v854 = vunpack.c.l.b16 %v279
  %v855 = vunpack.c.l.b16 %v280
  %v856 = vunpack.c.l.b16 %v281
  %v857 = vunpack.c.l.b16 %v282
  %v858 = vunpack.c.l.b16 %v283
  %v859 = vunpack.c.l.b16 %v284
  %v860 = vunpack.c.l.b16 %v285
  %v861 = vunpack.c.l.b16 %v286
  %v862 = vunpack.c.l.b16 %v287
  %v863 = vunpack.c.l.b16 %v288
  %v864 = vunpack.c.l.b16 %v289
  %v865 = vunpack.c.l.b16 %v290
  %v866 = vunpack.c.l.b16 %v291
  %v867 = vunpack.c.l.b16 %v292
  %v868 = vpack.c.b16 %v613, %v612
  %v869 = vpack.c.b16 %v615, %v614
  %v870 = vpack.c.b16 %v617, %v616
  %v871 = vpack.c.b16 %v619, %v618
  %v872 = vpack.c.b16 %v621, %v620
  %v873 = vpack.c.b16 %v623, %v622
  %v874 = vpack.c.b16 %v625, %v624
  %v875 = vpack.c.b16 %v627, %v626
  %v876 = vpack.c.b16 %v629, %v628
  %v877 = vpack.c.b16 %v631, %v630
  %v878 = vpack.c.b16 %v633, %v632
  %v879 = vpack.c.b16 %v635, %v634
  %v880 = vpack.c.b16 %v637, %v636
  %v881 = vpack.c.b16 %v639, %v638
  %v882 = vpack.c.b16 %v641, %v640
  %v883 = vpack.c.b16 %v643, %v642
  %v884 = vpack.c.b16 %v645, %v644
  %v885 = vpack.c.b16 %v647, %v646
  %v886 = vpack.c.b16 %v649, %v648
  %v887 = vpack.c.b16 %v651, %v650
  %v888 = vpack.c.b16 %v653, %v652
  %v889 = vpack.c.b16 %v655, %v654
  %v890 = vpack.c.b16 %v657, %v656
  %v891 = vpack.c.b16 %v659, %v658
  %v892 = vpack.c.b16 %v661, %v660
  %v893 = vpack.c.b16 %v663, %v662
  %v894 = vpack.c.b16 %v665, %v664
  %v895 = vpack.c.b16 %v667, %v666
  %v896 = vpack.c.b16 %v669, %v668
  %v897 = vpack.c.b16 %v671, %v670
  %v898 = vpack.c.b16 %v673, %v672
  %v899 = vpack.c.b16 %v675, %v674
  %v900 = vpack.c.b16 %v677, %v676
  %v901 = vpack.c.b16 %v679, %v678
  %v902 = vpack.c.b16 %v681, %v680
  %v903 = vpack.c.b16 %v683, %v682
  %v904 = vpack.c.b16 %v685, %v684
  %v905 = vpack.c.b16 %v687, %v686
  %v906 = vpack.c.b16 %v689, %v688
  %v907 = vpack.c.b16 %v691, %v690
  %v908 = vpack.c.b16 %v693, %v692
  %v909 = vpack.c.b16 %v695, %v694
  %v910 = vpack.c.b16 %v697, %v696
  %v911 = vpack.c.b16 %v699, %v698
  %v912 = vpack.c.b16 %v701, %v700
  %v913 = vpack.c.b16 %v703, %v702
  %v914 = vpack.c.b16 %v705, %v704
  %v915 = vpack.c.b16 %v707, %v706
  %v916 = vpack.c.b16 %v709, %v708
  %v917 = vpack.c.b16 %v711, %v710
  %v918 = vpack.c.b16 %v713, %v712
  %v919 = vpack.c.b16 %v715, %v714
  %v920 = vpack.c.b16 %v717, %v716
  %v921 = vpack.c.b16 %v719, %v718
  %v922 = vpack.c.b16 %v721, %v720
  %v923 = vpack.c.b16 %v723, %v722
  %v924 = vpack.c.b16 %v725, %v724
  %v925 = vpack.c.b16 %v727, %v726
  %v926 = vpack.c.b16 %v729, %v728
  %v927 = vpack.c.b16 %v731, %v730
  %v928 = vpack.c.b16 %v733, %v732
  %v929 = vpack.c.b16 %v735, %v734
  %v930 = vpack.c.b16 %v737, %v736
  %v931 = vpack.c.b16 %v739, %v738
  %v932 = vpack.c.b16 %v741, %v740
  %v933 = vpack.c.b16 %v743, %v742
  %v934 = vpack.c.b16 %v745, %v744
  %v935 = vpack.c.b16 %v747, %v746
  %v936 = vpack.c.b16 %v749, %v748
  %v937 = vpack.c.b16 %v751, %v750
  %v938 = vpack.c.b16 %v753, %v752
  %v939 = vpack.c.b16 %v755, %v754
  %v940 = vpack.c.b16 %v757, %v756
  %v941 = vpack.c.b16 %v759, %v758
  %v942 = vpack.c.b16 %v761, %v760
  %v943 = vpack.c.b16 %v763, %v762
  %v944 = vpack.c.b16 %v765, %v764
  %v945 = vpack.c.b16 %v767, %v766
  %v946 = vpack.c.b16 %v769, %v768
  %v947 = vpack.c.b16 %v771, %v770
  %v948 = vpack.c.b16 %v773, %v772
  %v949 = vpack.c.b16 %v775, %v774
  %v950 = vpack.c.b16 %v777, %v776
  %v951 = vpack.c.b16 %v779, %v778
  %v952 = vpack.c.b16 %v781, %v780
  %v953 = vpack.c.b16 %v783, %v782
  %v954 = vpack.c.b16 %v785, %v784
  %v955 = vpack.c.b16 %v787, %v786
  %v956 = vpack.c.b16 %v789, %v788
  %v957 = vpack.c.b16 %v791, %v790
  %v958 = vpack.c.b16 %v793, %v792
  %v959 = vpack.c.b16 %v795, %v794
  %v960 = vpack.c.b16 %v797, %v796
  %v961 = vpack.c.b16 %v799, %v798
  %v962 = vpack.c.b16 %v801, %v800
  %v963 = vpack.c.b16 %v803, %v802
  %v964 = vpack.c.b16 %v805, %v804
  %v965 = vpack.c.b16 %v807, %v806
  %v966 = vpack.c.b16 %v809, %v808
  %v967 = vpack.c.b16 %v811, %v810
  %v968 = vpack.c.b16 %v813, %v812
  %v969 = vpack.c.b16 %v815, %v814
  %v970 = vpack.c.b16 %v817, %v816
  %v971 = vpack.c.b16 %v819, %v818
  %v972 = vpack.c.b16 %v821, %v820
  %v973 = vpack.c.b16 %v823, %v822
  %v974 = vpack.c.b16 %v825, %v824
  %v975 = vpack.c.b16 %v827, %v826
  %v976 = vpack.c.b16 %v829, %v828
  %v977 = vpack.c.b16 %v831, %v830
  %v978 = vpack.c.b16 %v833, %v832
  %v979 = vpack.c.b16 %v835, %v834
  %v980 = vpack.c.b16 %v837, %v836
  %v981 = vpack.c.b16 %v839, %v838
  %v982 = vpack.c.b16 %v841, %v840
  %v983 = vpack.c.b16 %v843, %v842
  %v984 = vpack.c.b16 %v845, %v844
  %v985 = vpack.c.b16 %v847, %v846
  %v986 = vpack.c.b16 %v849, %v848
  %v987 = vpack.c.b16 %v851, %v850
  %v988 = vpack.c.b16 %v853, %v852
  %v989 = vpack.c.b16 %v855, %v854
  %v990 = vpack.c.b16 %v857, %v856
  %v991 = vpack.c.b16 %v859, %v858
  %v992 = vpack.c.b16 %v861, %v860
  %v993 = vpack.c.b16 %v863, %v862
  %v994 = vpack.c.b16 %v865, %v864
  %v995 = vpack.c.b16 %v867, %v866
  %1124 = vmatprep.subr.bf16.mxu0 0
  %1125 = vmatpush1.bf16.msra.mxu0 %v868
  %1126 = vmatprep.subr.bf16.mxu0 0
  %1127 = vmatpush1.bf16.msra.mxu0 %v869
  %1128 = vmatprep.subr.bf16.mxu0 0
  %1129 = vmatpush1.bf16.msra.mxu0 %v870
  %1130 = vmatprep.subr.bf16.mxu0 0
  %1131 = vmatpush1.bf16.msra.mxu0 %v871
  %1132 = vmatprep.subr.bf16.mxu0 0
  %1133 = vmatpush1.bf16.msra.mxu0 %v872
  %1134 = vmatprep.subr.bf16.mxu0 0
  %1135 = vmatpush1.bf16.msra.mxu0 %v873
  %1136 = vmatprep.subr.bf16.mxu0 0
  %1137 = vmatpush1.bf16.msra.mxu0 %v874
  %1138 = vmatprep.subr.bf16.mxu0 0
  %1139 = vmatpush1.bf16.msra.mxu0 %v875
  %1140 = vmatprep.subr.bf16.mxu0 0
  %1141 = vmatpush1.bf16.msra.mxu0 %v876
  %1142 = vmatprep.subr.bf16.mxu0 0
  %1143 = vmatpush1.bf16.msra.mxu0 %v877
  %1144 = vmatprep.subr.bf16.mxu0 0
  %1145 = vmatpush1.bf16.msra.mxu0 %v878
  %1146 = vmatprep.subr.bf16.mxu0 0
  %1147 = vmatpush1.bf16.msra.mxu0 %v879
  %1148 = vmatprep.subr.bf16.mxu0 0
  %1149 = vmatpush1.bf16.msra.mxu0 %v880
  %1150 = vmatprep.subr.bf16.mxu0 0
  %1151 = vmatpush1.bf16.msra.mxu0 %v881
  %1152 = vmatprep.subr.bf16.mxu0 0
  %1153 = vmatpush1.bf16.msra.mxu0 %v882
  %1154 = vmatprep.subr.bf16.mxu0 0
  %1155 = vmatpush1.bf16.msra.mxu0 %v883
  %1156 = vmatprep.mubr.bf16.mxu0 %v325
  %1157 = vmatmul.mubr.bf16.gmra.mrb[0].mxu0 %v324
  %v1158 = vpop.f32.mrb[0].mxu0
  %v1159 = vadd.f32 %v298, %v1158
  %v1160 = vpop.f32.mrb[0].mxu0
  %v1161 = vpop.f32.mrb[0].mxu0
  %v1162 = vpop.f32.mrb[0].mxu0
  %1163 = vdwg.mxu0
  %1164 = vmatprep.subr.bf16.mxu0 0
  %1165 = vmatpush1.bf16.msra.mxu0 %v884
  %1166 = vmatprep.subr.bf16.mxu0 0
  %1167 = vmatpush1.bf16.msra.mxu0 %v885
  %1168 = vmatprep.subr.bf16.mxu0 0
  %1169 = vmatpush1.bf16.msra.mxu0 %v886
  %1170 = vmatprep.subr.bf16.mxu0 0
  %1171 = vmatpush1.bf16.msra.mxu0 %v887
  %1172 = vmatprep.subr.bf16.mxu0 0
  %1173 = vmatpush1.bf16.msra.mxu0 %v888
  %1174 = vmatprep.subr.bf16.mxu0 0
  %1175 = vmatpush1.bf16.msra.mxu0 %v889
  %1176 = vmatprep.subr.bf16.mxu0 0
  %1177 = vmatpush1.bf16.msra.mxu0 %v890
  %1178 = vmatprep.subr.bf16.mxu0 0
  %1179 = vmatpush1.bf16.msra.mxu0 %v891
  %1180 = vmatprep.subr.bf16.mxu0 0
  %1181 = vmatpush1.bf16.msra.mxu0 %v892
  %1182 = vmatprep.subr.bf16.mxu0 0
  %1183 = vmatpush1.bf16.msra.mxu0 %v893
  %1184 = vmatprep.subr.bf16.mxu0 0
  %1185 = vmatpush1.bf16.msra.mxu0 %v894
  %1186 = vmatprep.subr.bf16.mxu0 0
  %1187 = vmatpush1.bf16.msra.mxu0 %v895
  %1188 = vmatprep.subr.bf16.mxu0 0
  %1189 = vmatpush1.bf16.msra.mxu0 %v896
  %1190 = vmatprep.subr.bf16.mxu0 0
  %1191 = vmatpush1.bf16.msra.mxu0 %v897
  %1192 = vmatprep.subr.bf16.mxu0 0
  %1193 = vmatpush1.bf16.msra.mxu0 %v898
  %1194 = vmatprep.subr.bf16.mxu0 0
  %1195 = vmatpush1.bf16.msra.mxu0 %v899
  %1196 = vmatprep.mubr.bf16.mxu0 %v327
  %1197 = vmatmul.mubr.bf16.gmra.mrb[0].mxu0 %v326
  %v1198 = vpop.f32.mrb[0].mxu0
  %v1199 = vadd.f32 %v1159, %v1198
  %v1200 = vpop.f32.mrb[0].mxu0
  %v1201 = vpop.f32.mrb[0].mxu0
  %v1202 = vpop.f32.mrb[0].mxu0
  %1203 = vdwg.mxu0
  %1204 = vmatprep.subr.bf16.mxu0 0
  %1205 = vmatpush1.bf16.msra.mxu0 %v900
  %1206 = vmatprep.subr.bf16.mxu0 0
  %1207 = vmatpush1.bf16.msra.mxu0 %v901
  %1208 = vmatprep.subr.bf16.mxu0 0
  %1209 = vmatpush1.bf16.msra.mxu0 %v902
  %1210 = vmatprep.subr.bf16.mxu0 0
  %1211 = vmatpush1.bf16.msra.mxu0 %v903
  %1212 = vmatprep.subr.bf16.mxu0 0
  %1213 = vmatpush1.bf16.msra.mxu0 %v904
  %1214 = vmatprep.subr.bf16.mxu0 0
  %1215 = vmatpush1.bf16.msra.mxu0 %v905
  %1216 = vmatprep.subr.bf16.mxu0 0
  %1217 = vmatpush1.bf16.msra.mxu0 %v906
  %1218 = vmatprep.subr.bf16.mxu0 0
  %1219 = vmatpush1.bf16.msra.mxu0 %v907
  %1220 = vmatprep.subr.bf16.mxu0 0
  %1221 = vmatpush1.bf16.msra.mxu0 %v908
  %1222 = vmatprep.subr.bf16.mxu0 0
  %1223 = vmatpush1.bf16.msra.mxu0 %v909
  %1224 = vmatprep.subr.bf16.mxu0 0
  %1225 = vmatpush1.bf16.msra.mxu0 %v910
  %1226 = vmatprep.subr.bf16.mxu0 0
  %1227 = vmatpush1.bf16.msra.mxu0 %v911
  %1228 = vmatprep.subr.bf16.mxu0 0
  %1229 = vmatpush1.bf16.msra.mxu0 %v912
  %1230 = vmatprep.subr.bf16.mxu0 0
  %1231 = vmatpush1.bf16.msra.mxu0 %v913
  %1232 = vmatprep.subr.bf16.mxu0 0
  %1233 = vmatpush1.bf16.msra.mxu0 %v914
  %1234 = vmatprep.subr.bf16.mxu0 0
  %1235 = vmatpush1.bf16.msra.mxu0 %v915
  %1236 = vmatprep.mubr.bf16.mxu0 %v329
  %1237 = vmatmul.mubr.bf16.gmra.mrb[0].mxu0 %v328
  %v1238 = vpop.f32.mrb[0].mxu0
  %v1239 = vadd.f32 %v1199, %v1238
  %v1240 = vpop.f32.mrb[0].mxu0
  %v1241 = vpop.f32.mrb[0].mxu0
  %v1242 = vpop.f32.mrb[0].mxu0
  %1243 = vdwg.mxu0
  %1244 = vmatprep.subr.bf16.mxu0 0
  %1245 = vmatpush1.bf16.msra.mxu0 %v916
  %1246 = vmatprep.subr.bf16.mxu0 0
  %1247 = vmatpush1.bf16.msra.mxu0 %v917
  %1248 = vmatprep.subr.bf16.mxu0 0
  %1249 = vmatpush1.bf16.msra.mxu0 %v918
  %1250 = vmatprep.subr.bf16.mxu0 0
  %1251 = vmatpush1.bf16.msra.mxu0 %v919
  %1252 = vmatprep.subr.bf16.mxu0 0
  %1253 = vmatpush1.bf16.msra.mxu0 %v920
  %1254 = vmatprep.subr.bf16.mxu0 0
  %1255 = vmatpush1.bf16.msra.mxu0 %v921
  %1256 = vmatprep.subr.bf16.mxu0 0
  %1257 = vmatpush1.bf16.msra.mxu0 %v922
  %1258 = vmatprep.subr.bf16.mxu0 0
  %1259 = vmatpush1.bf16.msra.mxu0 %v923
  %1260 = vmatprep.subr.bf16.mxu0 0
  %1261 = vmatpush1.bf16.msra.mxu0 %v924
  %1262 = vmatprep.subr.bf16.mxu0 0
  %1263 = vmatpush1.bf16.msra.mxu0 %v925
  %1264 = vmatprep.subr.bf16.mxu0 0
  %1265 = vmatpush1.bf16.msra.mxu0 %v926
  %1266 = vmatprep.subr.bf16.mxu0 0
  %1267 = vmatpush1.bf16.msra.mxu0 %v927
  %1268 = vmatprep.subr.bf16.mxu0 0
  %1269 = vmatpush1.bf16.msra.mxu0 %v928
  %1270 = vmatprep.subr.bf16.mxu0 0
  %1271 = vmatpush1.bf16.msra.mxu0 %v929
  %1272 = vmatprep.subr.bf16.mxu0 0
  %1273 = vmatpush1.bf16.msra.mxu0 %v930
  %1274 = vmatprep.subr.bf16.mxu0 0
  %1275 = vmatpush1.bf16.msra.mxu0 %v931
  %1276 = vmatprep.mubr.bf16.mxu0 %v331
  %1277 = vmatmul.mubr.bf16.gmra.mrb[0].mxu0 %v330
  %v1278 = vpop.f32.mrb[0].mxu0
  %v1279 = vadd.f32 %v1239, %v1278
  %v1280 = vpop.f32.mrb[0].mxu0
  %v1281 = vpop.f32.mrb[0].mxu0
  %v1282 = vpop.f32.mrb[0].mxu0
  %1283 = vdwg.mxu0
  %1284 = vmatprep.subr.bf16.mxu0 0
  %1285 = vmatpush1.bf16.msra.mxu0 %v932
  %1286 = vmatprep.subr.bf16.mxu0 0
  %1287 = vmatpush1.bf16.msra.mxu0 %v933
  %1288 = vmatprep.subr.bf16.mxu0 0
  %1289 = vmatpush1.bf16.msra.mxu0 %v934
  %1290 = vmatprep.subr.bf16.mxu0 0
  %1291 = vmatpush1.bf16.msra.mxu0 %v935
  %1292 = vmatprep.subr.bf16.mxu0 0
  %1293 = vmatpush1.bf16.msra.mxu0 %v936
  %1294 = vmatprep.subr.bf16.mxu0 0
  %1295 = vmatpush1.bf16.msra.mxu0 %v937
  %1296 = vmatprep.subr.bf16.mxu0 0
  %1297 = vmatpush1.bf16.msra.mxu0 %v938
  %1298 = vmatprep.subr.bf16.mxu0 0
  %1299 = vmatpush1.bf16.msra.mxu0 %v939
  %1300 = vmatprep.subr.bf16.mxu0 0
  %1301 = vmatpush1.bf16.msra.mxu0 %v940
  %1302 = vmatprep.subr.bf16.mxu0 0
  %1303 = vmatpush1.bf16.msra.mxu0 %v941
  %1304 = vmatprep.subr.bf16.mxu0 0
  %1305 = vmatpush1.bf16.msra.mxu0 %v942
  %1306 = vmatprep.subr.bf16.mxu0 0
  %1307 = vmatpush1.bf16.msra.mxu0 %v943
  %1308 = vmatprep.subr.bf16.mxu0 0
  %1309 = vmatpush1.bf16.msra.mxu0 %v944
  %1310 = vmatprep.subr.bf16.mxu0 0
  %1311 = vmatpush1.bf16.msra.mxu0 %v945
  %1312 = vmatprep.subr.bf16.mxu0 0
  %1313 = vmatpush1.bf16.msra.mxu0 %v946
  %1314 = vmatprep.subr.bf16.mxu0 0
  %1315 = vmatpush1.bf16.msra.mxu0 %v947
  %1316 = vmatprep.mubr.bf16.mxu0 %v333
  %1317 = vmatmul.mubr.bf16.gmra.mrb[0].mxu0 %v332
  %v1318 = vpop.f32.mrb[0].mxu0
  %v1319 = vadd.f32 %v1279, %v1318
  %v1320 = vpop.f32.mrb[0].mxu0
  %v1321 = vpop.f32.mrb[0].mxu0
  %v1322 = vpop.f32.mrb[0].mxu0
  %1323 = vdwg.mxu0
  %1324 = vmatprep.subr.bf16.mxu0 0
  %1325 = vmatpush1.bf16.msra.mxu0 %v948
  %1326 = vmatprep.subr.bf16.mxu0 0
  %1327 = vmatpush1.bf16.msra.mxu0 %v949
  %1328 = vmatprep.subr.bf16.mxu0 0
  %1329 = vmatpush1.bf16.msra.mxu0 %v950
  %1330 = vmatprep.subr.bf16.mxu0 0
  %1331 = vmatpush1.bf16.msra.mxu0 %v951
  %1332 = vmatprep.subr.bf16.mxu0 0
  %1333 = vmatpush1.bf16.msra.mxu0 %v952
  %1334 = vmatprep.subr.bf16.mxu0 0
  %1335 = vmatpush1.bf16.msra.mxu0 %v953
  %1336 = vmatprep.subr.bf16.mxu0 0
  %1337 = vmatpush1.bf16.msra.mxu0 %v954
  %1338 = vmatprep.subr.bf16.mxu0 0
  %1339 = vmatpush1.bf16.msra.mxu0 %v955
  %1340 = vmatprep.subr.bf16.mxu0 0
  %1341 = vmatpush1.bf16.msra.mxu0 %v956
  %1342 = vmatprep.subr.bf16.mxu0 0
  %1343 = vmatpush1.bf16.msra.mxu0 %v957
  %1344 = vmatprep.subr.bf16.mxu0 0
  %1345 = vmatpush1.bf16.msra.mxu0 %v958
  %1346 = vmatprep.subr.bf16.mxu0 0
  %1347 = vmatpush1.bf16.msra.mxu0 %v959
  %1348 = vmatprep.subr.bf16.mxu0 0
  %1349 = vmatpush1.bf16.msra.mxu0 %v960
  %1350 = vmatprep.subr.bf16.mxu0 0
  %1351 = vmatpush1.bf16.msra.mxu0 %v961
  %1352 = vmatprep.subr.bf16.mxu0 0
  %1353 = vmatpush1.bf16.msra.mxu0 %v962
  %1354 = vmatprep.subr.bf16.mxu0 0
  %1355 = vmatpush1.bf16.msra.mxu0 %v963
  %1356 = vmatprep.mubr.bf16.mxu0 %v335
  %1357 = vmatmul.mubr.bf16.gmra.mrb[0].mxu0 %v334
  %v1358 = vpop.f32.mrb[0].mxu0
  %v1359 = vadd.f32 %v1319, %v1358
  %v1360 = vpop.f32.mrb[0].mxu0
  %v1361 = vpop.f32.mrb[0].mxu0
  %v1362 = vpop.f32.mrb[0].mxu0
  %1363 = vdwg.mxu0
  %1364 = vmatprep.subr.bf16.mxu0 0
  %1365 = vmatpush1.bf16.msra.mxu0 %v964
  %1366 = vmatprep.subr.bf16.mxu0 0
  %1367 = vmatpush1.bf16.msra.mxu0 %v965
  %1368 = vmatprep.subr.bf16.mxu0 0
  %1369 = vmatpush1.bf16.msra.mxu0 %v966
  %1370 = vmatprep.subr.bf16.mxu0 0
  %1371 = vmatpush1.bf16.msra.mxu0 %v967
  %1372 = vmatprep.subr.bf16.mxu0 0
  %1373 = vmatpush1.bf16.msra.mxu0 %v968
  %1374 = vmatprep.subr.bf16.mxu0 0
  %1375 = vmatpush1.bf16.msra.mxu0 %v969
  %1376 = vmatprep.subr.bf16.mxu0 0
  %1377 = vmatpush1.bf16.msra.mxu0 %v970
  %1378 = vmatprep.subr.bf16.mxu0 0
  %1379 = vmatpush1.bf16.msra.mxu0 %v971
  %1380 = vmatprep.subr.bf16.mxu0 0
  %1381 = vmatpush1.bf16.msra.mxu0 %v972
  %1382 = vmatprep.subr.bf16.mxu0 0
  %1383 = vmatpush1.bf16.msra.mxu0 %v973
  %1384 = vmatprep.subr.bf16.mxu0 0
  %1385 = vmatpush1.bf16.msra.mxu0 %v974
  %1386 = vmatprep.subr.bf16.mxu0 0
  %1387 = vmatpush1.bf16.msra.mxu0 %v975
  %1388 = vmatprep.subr.bf16.mxu0 0
  %1389 = vmatpush1.bf16.msra.mxu0 %v976
  %1390 = vmatprep.subr.bf16.mxu0 0
  %1391 = vmatpush1.bf16.msra.mxu0 %v977
  %1392 = vmatprep.subr.bf16.mxu0 0
  %1393 = vmatpush1.bf16.msra.mxu0 %v978
  %1394 = vmatprep.subr.bf16.mxu0 0
  %1395 = vmatpush1.bf16.msra.mxu0 %v979
  %1396 = vmatprep.mubr.bf16.mxu0 %v337
  %1397 = vmatmul.mubr.bf16.gmra.mrb[0].mxu0 %v336
  %v1398 = vpop.f32.mrb[0].mxu0
  %v1399 = vadd.f32 %v1359, %v1398
  %v1400 = vpop.f32.mrb[0].mxu0
  %v1401 = vpop.f32.mrb[0].mxu0
  %v1402 = vpop.f32.mrb[0].mxu0
  %1403 = vdwg.mxu0
  %1404 = vmatprep.subr.bf16.mxu0 0
  %1405 = vmatpush1.bf16.msra.mxu0 %v980
  %1406 = vmatprep.subr.bf16.mxu0 0
  %1407 = vmatpush1.bf16.msra.mxu0 %v981
  %1408 = vmatprep.subr.bf16.mxu0 0
  %1409 = vmatpush1.bf16.msra.mxu0 %v982
  %1410 = vmatprep.subr.bf16.mxu0 0
  %1411 = vmatpush1.bf16.msra.mxu0 %v983
  %1412 = vmatprep.subr.bf16.mxu0 0
  %1413 = vmatpush1.bf16.msra.mxu0 %v984
  %1414 = vmatprep.subr.bf16.mxu0 0
  %1415 = vmatpush1.bf16.msra.mxu0 %v985
  %1416 = vmatprep.subr.bf16.mxu0 0
  %1417 = vmatpush1.bf16.msra.mxu0 %v986
  %1418 = vmatprep.subr.bf16.mxu0 0
  %1419 = vmatpush1.bf16.msra.mxu0 %v987
  %1420 = vmatprep.subr.bf16.mxu0 0
  %1421 = vmatpush1.bf16.msra.mxu0 %v988
  %1422 = vmatprep.subr.bf16.mxu0 0
  %1423 = vmatpush1.bf16.msra.mxu0 %v989
  %1424 = vmatprep.subr.bf16.mxu0 0
  %1425 = vmatpush1.bf16.msra.mxu0 %v990
  %1426 = vmatprep.subr.bf16.mxu0 0
  %1427 = vmatpush1.bf16.msra.mxu0 %v991
  %1428 = vmatprep.subr.bf16.mxu0 0
  %1429 = vmatpush1.bf16.msra.mxu0 %v992
  %1430 = vmatprep.subr.bf16.mxu0 0
  %1431 = vmatpush1.bf16.msra.mxu0 %v993
  %1432 = vmatprep.subr.bf16.mxu0 0
  %1433 = vmatpush1.bf16.msra.mxu0 %v994
  %1434 = vmatprep.subr.bf16.mxu0 0
  %1435 = vmatpush1.bf16.msra.mxu0 %v995
  %1436 = vmatprep.mubr.bf16.mxu0 %v339
  %1437 = vmatmul.mubr.bf16.gmra.mrb[0].mxu0 %v338
  %v1438 = vpop.f32.mrb[0].mxu0
  %v1439 = vadd.f32 %v1399, %v1438
  %v1440 = vpop.f32.mrb[0].mxu0
  %v1441 = vpop.f32.mrb[0].mxu0
  %v1442 = vpop.f32.mrb[0].mxu0
  %1443 = vdwg.mxu0
  %vm1444 = vcmp.ge.f32.partialorder %v1439, 0.0
  %v1445 = vmul.f32 %v1439, 0.1
  %v1446 = vsel %vm1444, %v1439, %v1445
  %v1447 = vld [vmem:[%s3] sm:$0xff]
  %v1448 = vld [vmem:[%s3 + $0x8] sm:$0xff]
  %v1449 = vld [vmem:[%s3 + $0x10] sm:$0xff]
  %v1450 = vld [vmem:[%s3 + $0x18] sm:$0xff]
  %v1451 = vld [vmem:[%s4] sm:$0x1]
  %v1453 = vlaneseq
  %v1454 = vshrl.u32 %v1453, 7
  %v1455 = vsub.s32 0, %v1454
  %v1456 = vrot.slane %v1451, %v1455
  %vm1458 = vcmask 261120
  %v1460 = vsel %vm1458, %v1446, 0
  %1462 = vmatprep.subr.mxu0 0.0
  %1463 = vmatpush1.msra.mxu0 %v1447
  %1464 = vmatprep.subr.mxu0 0.0
  %1465 = vmatpush1.msra.mxu0 %v1448
  %1466 = vmatprep.subr.mxu0 0.0
  %1467 = vmatpush1.msra.mxu0 %v1449
  %1468 = vmatprep.subr.mxu0 0.0
  %1469 = vmatpush1.msra.mxu0 %v1450
  %1470 = vmatprep.subr.mxu0 0.0
  %1471 = vmatpush1.msra.mxu0 0.0
  %1472 = vmatprep.subr.mxu0 0.0
  %1473 = vmatpush1.msra.mxu0 0.0
  %1474 = vmatprep.subr.mxu0 0.0
  %1475 = vmatpush1.msra.mxu0 0.0
  %1476 = vmatprep.subr.mxu0 0.0
  %1477 = vmatpush1.msra.mxu0 0.0
  %1478 = vmatprep.subr.mxu0 0.0
  %1479 = vmatpush1.msra.mxu0 0.0
  %1480 = vmatprep.subr.mxu0 0.0
  %1481 = vmatpush1.msra.mxu0 0.0
  %1482 = vmatprep.subr.mxu0 0.0
  %1483 = vmatpush1.msra.mxu0 0.0
  %1484 = vmatprep.subr.mxu0 0.0
  %1485 = vmatpush1.msra.mxu0 0.0
  %1486 = vmatprep.subr.mxu0 0.0
  %1487 = vmatpush1.msra.mxu0 0.0
  %1488 = vmatprep.subr.mxu0 0.0
  %1489 = vmatpush1.msra.mxu0 0.0
  %1490 = vmatprep.subr.mxu0 0.0
  %1491 = vmatpush1.msra.mxu0 0.0
  %1492 = vmatprep.subr.mxu0 0.0
  %1493 = vmatpush1.msra.mxu0 0.0
  %1494 = vmatprep.subr.mxu0 0.0
  %1495 = vmatpush1.msra.mxu0 0.0
  %1496 = vmatprep.subr.mxu0 0.0
  %1497 = vmatpush1.msra.mxu0 0.0
  %1498 = vmatprep.subr.mxu0 0.0
  %1499 = vmatpush1.msra.mxu0 0.0
  %1500 = vmatprep.subr.mxu0 0.0
  %1501 = vmatpush1.msra.mxu0 0.0
  %1502 = vmatprep.subr.mxu0 0.0
  %1503 = vmatpush1.msra.mxu0 0.0
  %1504 = vmatprep.subr.mxu0 0.0
  %1505 = vmatpush1.msra.mxu0 0.0
  %1506 = vmatprep.subr.mxu0 0.0
  %1507 = vmatpush1.msra.mxu0 0.0
  %1508 = vmatprep.subr.mxu0 0.0
  %1509 = vmatpush1.msra.mxu0 0.0
  %1510 = vmatprep.subr.mxu0 0.0
  %1511 = vmatpush1.msra.mxu0 0.0
  %1512 = vmatprep.subr.mxu0 0.0
  %1513 = vmatpush1.msra.mxu0 0.0
  %1514 = vmatprep.subr.mxu0 0.0
  %1515 = vmatpush1.msra.mxu0 0.0
  %1516 = vmatprep.subr.mxu0 0.0
  %1517 = vmatpush1.msra.mxu0 0.0
  %1518 = vmatprep.subr.mxu0 0.0
  %1519 = vmatpush1.msra.mxu0 0.0
  %1520 = vmatprep.subr.mxu0 0.0
  %1521 = vmatpush1.msra.mxu0 0.0
  %1522 = vmatprep.subr.mxu0 0.0
  %1523 = vmatpush1.msra.mxu0 0.0
  %1524 = vmatprep.subr.mxu0 0.0
  %1525 = vmatpush1.msra.mxu0 0.0
  %1526 = vmatprep.mubr.f32.mxu0 0.0
  %1527 = vmatmul.mubr.f32.gmra.mrb[0].mxu0 %v1460
  %v1528 = vpop.f32.mrb[0].mxu0
  %v1529 = vadd.f32 %v1456, %v1528
  %v1530 = vpop.f32.mrb[0].mxu0
  %1531 = vdwg.mxu0
  %vm1532 = vcmp.ge.f32.partialorder %v1529, 0.0
  %v1533 = vmul.f32 %v1529, 0.1
  %v1534 = vsel %vm1532, %v1529, %v1533
  %v1535 = vld [vmem:[%s5] sm:$0x1]
  %v1536 = vld [vmem:[#allocation2] sm:$0x1]
  %1538 = vset.pattern.permute.xlu0 0
  %1539 = vperm.xlu0 %1538, %v1536
  %v1540 = vpop.permute.xlu0 %1539
  %v1542 = vlaneseq
  %v1543 = vshrl.u32 %v1542, 7
  %v1544 = vsub.s32 0, %v1543
  %v1545 = vrot.slane %v1540, %v1544
  %vm1546 = vcmask 130048
  %v1548 = vsel %vm1546, %v1535, 0
  %v1551 = vsel %vm1546, %v1534, 0
  %1553 = vmatprep.subr.mxu0 0.0
  %1554 = vmatpush1.xpose.msra.mxu0 %v1551
  %1555 = vmatprep.subr.mxu0 0.0
  %1556 = vmatpush1.xpose.msra.mxu0 0.0
  %1557 = vmatprep.subr.mxu0 0.0
  %1558 = vmatpush1.xpose.msra.mxu0 0.0
  %1559 = vmatprep.subr.mxu0 0.0
  %1560 = vmatpush1.xpose.msra.mxu0 0.0
  %1561 = vmatprep.subr.mxu0 0.0
  %1562 = vmatpush1.xpose.msra.mxu0 0.0
  %1563 = vmatprep.subr.mxu0 0.0
  %1564 = vmatpush1.xpose.msra.mxu0 0.0
  %1565 = vmatprep.subr.mxu0 0.0
  %1566 = vmatpush1.xpose.msra.mxu0 0.0
  %1567 = vmatprep.subr.mxu0 0.0
  %1568 = vmatpush1.xpose.msra.mxu0 0.0
  %1569 = vmatprep.subr.mxu0 0.0
  %1570 = vmatpush1.xpose.msra.mxu0 0.0
  %1571 = vmatprep.subr.mxu0 0.0
  %1572 = vmatpush1.xpose.msra.mxu0 0.0
  %1573 = vmatprep.subr.mxu0 0.0
  %1574 = vmatpush1.xpose.msra.mxu0 0.0
  %1575 = vmatprep.subr.mxu0 0.0
  %1576 = vmatpush1.xpose.msra.mxu0 0.0
  %1577 = vmatprep.subr.mxu0 0.0
  %1578 = vmatpush1.xpose.msra.mxu0 0.0
  %1579 = vmatprep.subr.mxu0 0.0
  %1580 = vmatpush1.xpose.msra.mxu0 0.0
  %1581 = vmatprep.subr.mxu0 0.0
  %1582 = vmatpush1.xpose.msra.mxu0 0.0
  %1583 = vmatprep.subr.mxu0 0.0
  %1584 = vmatpush1.xpose.msra.mxu0 0.0
  %1585 = vmatprep.subr.mxu0 0.0
  %1586 = vmatpush1.xpose.msra.mxu0 0.0
  %1587 = vmatprep.subr.mxu0 0.0
  %1588 = vmatpush1.xpose.msra.mxu0 0.0
  %1589 = vmatprep.subr.mxu0 0.0
  %1590 = vmatpush1.xpose.msra.mxu0 0.0
  %1591 = vmatprep.subr.mxu0 0.0
  %1592 = vmatpush1.xpose.msra.mxu0 0.0
  %1593 = vmatprep.subr.mxu0 0.0
  %1594 = vmatpush1.xpose.msra.mxu0 0.0
  %1595 = vmatprep.subr.mxu0 0.0
  %1596 = vmatpush1.xpose.msra.mxu0 0.0
  %1597 = vmatprep.subr.mxu0 0.0
  %1598 = vmatpush1.xpose.msra.mxu0 0.0
  %1599 = vmatprep.subr.mxu0 0.0
  %1600 = vmatpush1.xpose.msra.mxu0 0.0
  %1601 = vmatprep.subr.mxu0 0.0
  %1602 = vmatpush1.xpose.msra.mxu0 0.0
  %1603 = vmatprep.subr.mxu0 0.0
  %1604 = vmatpush1.xpose.msra.mxu0 0.0
  %1605 = vmatprep.subr.mxu0 0.0
  %1606 = vmatpush1.xpose.msra.mxu0 0.0
  %1607 = vmatprep.subr.mxu0 0.0
  %1608 = vmatpush1.xpose.msra.mxu0 0.0
  %1609 = vmatprep.subr.mxu0 0.0
  %1610 = vmatpush1.xpose.msra.mxu0 0.0
  %1611 = vmatprep.subr.mxu0 0.0
  %1612 = vmatpush1.xpose.msra.mxu0 0.0
  %1613 = vmatprep.subr.mxu0 0.0
  %1614 = vmatpush1.xpose.msra.mxu0 0.0
  %1615 = vmatprep.subr.mxu0 0.0
  %1616 = vmatpush1.xpose.msra.mxu0 0.0
  %1617 = vmatprep.mubr.f32.mxu0 0.0
  %1618 = vmatmul.mubr.f32.gmra.mrb[0].mxu0 %v1548
  %v1619 = vpop.f32.mrb[0].mxu0
  %v1620 = vadd.f32 %v1545, %v1619
  %v1621 = vpop.f32.mrb[0].mxu0
  %1622 = vdwg.mxu0
  %v1623 = vxor.u32 %v1620, 2147483648
  %v1624 = vmul.f32 %v1623, 1.442695
  %v1625 = vpow.pop %v1624
  %v1626 = vadd.f32 %v1625, 1.0
  %v1627 = vrcp.pop %v1626
  %v1628 = vmul.f32 1.0, %v1627
  %vm1629 = vcmask 57344
  %1630 = vst.msk [vmem:[%s7] sm:$0x1] %vm1629, %v1628
  // Predicated region
  $region30: #{net_forward.1} parent=0 // pred_check
    _
  $region31: #{net_forward.1} parent=0 // pred_check_branch
    %1632 = sbr.rel (0) target = $region33
  $region32: #{net_forward.1} parent=0 // pred_region
    _
  $region33: #{net_forward.1} parent=0 // pred_fallthru
    _
  // Predicated region
  $region34: #{net_forward.1} parent=0 // pred_check
    _
  $region35: #{net_forward.1} parent=0 // pred_check_branch
    %1634 = sbr.rel (0) target = $region37
  $region36: #{net_forward.1} parent=0 // pred_region
    _
  $region37: #{net_forward.1} parent=0 // pred_fallthru
    _

</llo_original>
